<compile_context>
chip_gen: v7x
topology: tpu7x:2x2x1
jax: 0.10.0
libtpu: 0.0.40
codegen_flags: <defaults>
</compile_context>

<pallas_src>
import jax
import jax.numpy as jnp
from jax.experimental import pallas as pl
from jax.experimental.pallas import tpu as pltpu


def _chanwise_attn_kernel(gamma_ref, x_ref, o_ref, energy_ref):
    k = pl.program_id(1)
    nt = pl.num_programs(1) // 2

    x = x_ref[...]                                    # (C, TN), native dtype

    # ---- phase 1: accumulate the channel-channel Gram matrix ----
    @pl.when(k == 0)
    def _init():
        energy_ref[...] = jnp.zeros_like(energy_ref)

    @pl.when(k < nt)
    def _accumulate():
        # energy += X_tile @ X_tile^T, contracting the lane (spatial) axis of
        # both operands -- the MXU consumes X as an implicitly-transposed RHS,
        # no (N, C) transpose copy is materialized.
        energy_ref[...] += jax.lax.dot_general(
            x, x,
            dimension_numbers=(((1,), (1,)), ((), ())),
            preferred_element_type=jnp.float32)

    # ---- end of phase 1: softmax(rowmax(E)-E) == exp(rowmin(E)-E) / rowsum ----
    @pl.when(k == nt - 1)
    def _softmax():
        energy = energy_ref[...]
        row_min = jnp.min(energy, axis=-1, keepdims=True)   # fused reduction
        p = jnp.exp(row_min - energy)
        denom = jnp.sum(p, axis=-1, keepdims=True)
        r = pl.reciprocal(denom, approx=True)               # EUP slot (free)
        r = r * (2.0 - denom * r)                           # one Newton step
        energy_ref[...] = p * r                             # scratch now = attention

    # ---- phase 2: out_tile = gamma * (attn @ X_tile) + X_tile ----
    @pl.when(k >= nt)
    def _emit():
        attn = energy_ref[...]                              # (C, C) f32
        out = jnp.dot(attn, x, preferred_element_type=jnp.float32)
        gamma = gamma_ref[0]                                # scalar from SMEM
        o_ref[...] = (gamma * out + x).astype(o_ref.dtype)


def _round_up(v, m):
    return (v + m - 1) // m * m


def channelwise_attention(x_nchw, gamma, *, tile_n_target=512):
    """x_nchw: (B, C, H, W); gamma: (1,). Returns (B, C, H, W) like the torch forward."""
    B, C, H, W = x_nchw.shape
    N = H * W
    dtype = x_nchw.dtype
    itemsize = jnp.dtype(dtype).itemsize

    # Lane-align the flattened spatial axis and pick a spatial tile that is a
    # multiple of 128 so output stores stay lane-dense (no masked vst) and the
    # per-step VMEM footprint is bounded independently of H*W (v7x-safe).
    n_lane = _round_up(N, 128)
    TN = min(tile_n_target, n_lane)
    N_pad = _round_up(N, TN)
    NT = N_pad // TN

    x = x_nchw.reshape(B, C, N)
    if N_pad != N:
        # Zero padding is exact: padded spatial columns contribute 0 to the
        # Gram matrix and the corresponding output columns are sliced off.
        x = jnp.pad(x, ((0, 0), (0, 0), (0, N_pad - N)))

    # Double-buffered input + output tiles plus the (C, C) energy scratch.
    vmem_bytes = 2 * (C * TN * itemsize) * 2 + C * C * 4
    vmem_limit = int(min(max(4 * vmem_bytes, 16 * 1024 * 1024),
                         48 * 1024 * 1024))

    cost = pl.CostEstimate(
        flops=4 * B * C * C * N_pad,                # X@X^T and attn@X (2 flops/MAC)
        transcendentals=B * C * C,                  # exp in the softmax
        bytes_accessed=3 * B * C * N_pad * itemsize + B * C * C * 4,
    )

    out = pl.pallas_call(
        _chanwise_attn_kernel,
        out_shape=jax.ShapeDtypeStruct((B, C, N_pad), dtype),
        grid_spec=pltpu.PrefetchScalarGridSpec(
            num_scalar_prefetch=0,
            grid=(B, 2 * NT),
            in_specs=[
                pl.BlockSpec(memory_space=pltpu.SMEM),          # gamma (1,)
                # Same spatial tile is streamed in phase 1 (k) and phase 2 (k-NT).
                pl.BlockSpec((None, C, TN),
                             lambda b, k: (b, 0, jnp.where(k < NT, k, k - NT))),
            ],
            # Output blocks are only written during phase 2; during phase 1 the
            # index stays pinned at tile 0 (consecutive revisits, accumulator
            # style), so nothing is flushed before it has been produced.
            out_specs=pl.BlockSpec((None, C, TN),
                                   lambda b, k: (b, 0, jnp.maximum(k - NT, 0))),
            scratch_shapes=[pltpu.VMEM((C, C), jnp.float32)],
        ),
        compiler_params=pltpu.CompilerParams(
            # Batch elements are independent (shards across v7x's 2 TCs); the
            # phase/tile axis carries the energy accumulator -> arbitrary.
            dimension_semantics=("parallel", "arbitrary"),
            vmem_limit_bytes=vmem_limit,
        ),
        cost_estimate=cost,
    )(gamma, x)

    if N_pad != N:
        out = out[:, :, :N]
    return out.reshape(B, C, H, W)


def _reference(x_nchw, gamma):
    """Pure-JAX reference mirroring the torch forward."""
    B, C, H, W = x_nchw.shape
    x = x_nchw.reshape(B, C, H * W)
    energy = jnp.einsum("bcn,bdn->bcd", x, x)
    energy_new = jnp.max(energy, axis=-1, keepdims=True) - energy
    attn = jax.nn.softmax(energy_new, axis=-1)
    out = jnp.einsum("bcd,bdn->bcn", attn, x).reshape(B, C, H, W)
    return gamma[0] * out + x_nchw


if __name__ == "__main__":
    key = jax.random.PRNGKey(0)

    # Shapes per the module's forward: NCHW feature map.
    B, C, H, W = 2, 4, 16, 16
    x = jax.random.normal(key, (B, C, H, W), dtype=jnp.float32)

    # Parameter per the module's __init__: gamma = zeros(1).
    gamma_init = jnp.zeros((1,), dtype=jnp.float32)
    out = jax.block_until_ready(channelwise_attention(x, gamma_init))
    ref = _reference(x, gamma_init)
    assert jnp.allclose(out, ref, atol=1e-5, rtol=1e-5)

    # Non-trivial gamma exercises the attention path.
    gamma_test = jnp.array([0.5], dtype=jnp.float32)
    out2 = jax.block_until_ready(channelwise_attention(x, gamma_test))
    ref2 = _reference(x, gamma_test)
    assert jnp.allclose(out2, ref2, atol=1e-4, rtol=1e-4)

    # Larger spatial extent exercises the multi-tile (NT > 1) streaming path
    # and the lane padding (N = 576 -> padded to 1024, two 512-wide tiles).
    x3 = jax.random.normal(jax.random.PRNGKey(1), (1, 8, 24, 24), dtype=jnp.float32)
    gamma3 = jnp.array([0.25], dtype=jnp.float32)
    out3 = jax.block_until_ready(channelwise_attention(x3, gamma3))
    ref3 = _reference(x3, gamma3)
    assert jnp.allclose(out3, ref3, atol=1e-3, rtol=1e-3)

    print("KERNEL_OK")
</pallas_src>

<mosaic_0001>
module attributes {stable_mosaic.version = 11 : i64} {
  func.func @_chanwise_attn_kernel(%arg0: i32, %arg1: i32, %arg2: memref<1xf32, #tpu.memory_space<smem>>, %arg3: memref<1x4x256xf32, #tpu.memory_space<vmem>>, %arg4: memref<1x4x256xf32, #tpu.memory_space<vmem>>, %arg5: memref<4x4xf32, #tpu.memory_space<vmem>>) attributes {dimension_semantics = [#tpu.dimension_semantics<parallel>, #tpu.dimension_semantics<arbitrary>], iteration_bounds = array<i64: 2, 2>, scalar_prefetch = 0 : i64, scratch_operands = 1 : i64, tpu.core_type = #tpu.core_type<tc>, window_params = [{transform_indices = @transform_0, window_bounds = array<i64: 1>}, {transform_indices = @transform_1, window_bounds = array<i64: 1, 4, 256>}, {transform_indices = @transform_2, window_bounds = array<i64: 1, 4, 256>}]} {
    %c0 = arith.constant 0 : index
    %c0_0 = arith.constant 0 : index
    %c0_1 = arith.constant 0 : index
    %0 = vector.load %arg3[%c0, %c0_0, %c0_1] : memref<1x4x256xf32, #tpu.memory_space<vmem>>, vector<1x4x256xf32>
    %1 = vector.shape_cast %0 : vector<1x4x256xf32> to vector<4x256xf32>
    %c0_i32 = arith.constant 0 : i32
    %2 = arith.cmpi eq, %arg1, %c0_i32 : i32
    %3 = arith.extui %2 : i1 to i32
    %c0_i32_2 = arith.constant 0 : i32
    %4 = arith.cmpi ne, %3, %c0_i32_2 : i32
    scf.if %4 {
      %cst = arith.constant 0.000000e+00 : f32
      %14 = vector.broadcast %cst : f32 to vector<4x4xf32>
      %c0_8 = arith.constant 0 : index
      %c0_9 = arith.constant 0 : index
      %15 = vector.load %arg5[%c0_8, %c0_9] : memref<4x4xf32, #tpu.memory_space<vmem>>, vector<4x4xf32>
      tpu.vector_store %arg5[%c0_8, %c0_9], %14 {strides = array<i32>} : memref<4x4xf32, #tpu.memory_space<vmem>>, vector<4x4xf32>,
    } else {
    }
    %c1_i32 = arith.constant 1 : i32
    %5 = arith.cmpi slt, %arg1, %c1_i32 : i32
    %6 = arith.extui %5 : i1 to i32
    %c0_i32_3 = arith.constant 0 : i32
    %7 = arith.cmpi ne, %6, %c0_i32_3 : i32
    scf.if %7 {
      %c0_8 = arith.constant 0 : index
      %c0_9 = arith.constant 0 : index
      %14 = vector.load %arg5[%c0_8, %c0_9] : memref<4x4xf32, #tpu.memory_space<vmem>>, vector<4x4xf32>
      %cst = arith.constant dense<0.000000e+00> : vector<4x4xf32>
      %15 = tpu.matmul %1, %1, %cst {dimension_numbers = #tpu.dot_dimension_numbers<[1], [1], [0], [0], [0, 0, 1, 0], [], []>} : vector<4x256xf32>, vector<4x256xf32>, vector<4x4xf32> -> vector<4x4xf32>
      %16 = arith.addf %14, %15 : vector<4x4xf32>
      %c0_10 = arith.constant 0 : index
      %c0_11 = arith.constant 0 : index
      %17 = vector.load %arg5[%c0_10, %c0_11] : memref<4x4xf32, #tpu.memory_space<vmem>>, vector<4x4xf32>
      tpu.vector_store %arg5[%c0_10, %c0_11], %16 {strides = array<i32>} : memref<4x4xf32, #tpu.memory_space<vmem>>, vector<4x4xf32>,
    } else {
    }
    %c0_i32_4 = arith.constant 0 : i32
    %8 = arith.cmpi eq, %arg1, %c0_i32_4 : i32
    %9 = arith.extui %8 : i1 to i32
    %c0_i32_5 = arith.constant 0 : i32
    %10 = arith.cmpi ne, %9, %c0_i32_5 : i32
    scf.if %10 {
      %c0_8 = arith.constant 0 : index
      %c0_9 = arith.constant 0 : index
      %14 = vector.load %arg5[%c0_8, %c0_9] : memref<4x4xf32, #tpu.memory_space<vmem>>, vector<4x4xf32>
      %cst = arith.constant dense<0x7F800000> : vector<4xf32>
      %15 = vector.multi_reduction <minimumf>, %14, %cst [1] : vector<4x4xf32> to vector<4xf32>
      %16 = vector.shape_cast %15 : vector<4xf32> to vector<4x1xf32>
      %17 = vector.broadcast %16 : vector<4x1xf32> to vector<4x4xf32>
      %18 = arith.subf %17, %14 : vector<4x4xf32>
      %19 = math.exp %18 : vector<4x4xf32>
      %cst_10 = arith.constant dense<0.000000e+00> : vector<4xf32>
      %20 = vector.multi_reduction <add>, %19, %cst_10 [1] : vector<4x4xf32> to vector<4xf32>
      %21 = vector.shape_cast %20 : vector<4xf32> to vector<4x1xf32>
      %22 = tpu.reciprocal %21 {approx = true} : vector<4x1xf32> -> vector<4x1xf32>
      %23 = arith.mulf %21, %22 : vector<4x1xf32>
      %cst_11 = arith.constant 2.000000e+00 : f32
      %24 = vector.broadcast %cst_11 : f32 to vector<4x1xf32>
      %25 = arith.subf %24, %23 : vector<4x1xf32>
      %26 = arith.mulf %22, %25 : vector<4x1xf32>
      %27 = vector.broadcast %26 : vector<4x1xf32> to vector<4x4xf32>
      %28 = arith.mulf %19, %27 : vector<4x4xf32>
      %c0_12 = arith.constant 0 : index
      %c0_13 = arith.constant 0 : index
      %29 = vector.load %arg5[%c0_12, %c0_13] : memref<4x4xf32, #tpu.memory_space<vmem>>, vector<4x4xf32>
      tpu.vector_store %arg5[%c0_12, %c0_13], %28 {strides = array<i32>} : memref<4x4xf32, #tpu.memory_space<vmem>>, vector<4x4xf32>,
    } else {
    }
    %c1_i32_6 = arith.constant 1 : i32
    %11 = arith.cmpi sge, %arg1, %c1_i32_6 : i32
    %12 = arith.extui %11 : i1 to i32
    %c0_i32_7 = arith.constant 0 : i32
    %13 = arith.cmpi ne, %12, %c0_i32_7 : i32
    scf.if %13 {
      %c0_8 = arith.constant 0 : index
      %c0_9 = arith.constant 0 : index
      %14 = vector.load %arg5[%c0_8, %c0_9] : memref<4x4xf32, #tpu.memory_space<vmem>>, vector<4x4xf32>
      %cst = arith.constant dense<0.000000e+00> : vector<4x256xf32>
      %15 = tpu.matmul %14, %1, %cst {dimension_numbers = #tpu.dot_dimension_numbers<[1], [0], [0], [1], [0, 0, 1, 1], [], []>} : vector<4x4xf32>, vector<4x256xf32>, vector<4x256xf32> -> vector<4x256xf32>
      %c0_10 = arith.constant 0 : index
      %16 = memref.load %arg2[%c0_10] : memref<1xf32, #tpu.memory_space<smem>>
      %17 = vector.broadcast %16 : f32 to vector<4x256xf32>
      %18 = arith.mulf %17, %15 : vector<4x256xf32>
      %19 = arith.addf %18, %1 : vector<4x256xf32>
      %c0_11 = arith.constant 0 : index
      %c0_12 = arith.constant 0 : index
      %c0_13 = arith.constant 0 : index
      %20 = vector.load %arg4[%c0_11, %c0_12, %c0_13] : memref<1x4x256xf32, #tpu.memory_space<vmem>>, vector<1x4x256xf32>
      %21 = vector.shape_cast %20 : vector<1x4x256xf32> to vector<4x256xf32>
      %22 = vector.shape_cast %19 : vector<4x256xf32> to vector<1x4x256xf32>
      tpu.vector_store %arg4[%c0_11, %c0_12, %c0_13], %22 {strides = array<i32>} : memref<1x4x256xf32, #tpu.memory_space<vmem>>, vector<1x4x256xf32>,
    } else {
    }
    return
  }
  func.func @transform_0(%arg0: i32, %arg1: i32) -> i32 {
    %c0_i32 = arith.constant 0 : i32
    %c0_i32_0 = arith.constant 0 : i32
    return %c0_i32 : i32
  }
  func.func @transform_1(%arg0: i32, %arg1: i32) -> (i32, i32, i32) {
    %c1_i32 = arith.constant 1 : i32
    %0 = arith.cmpi slt, %arg1, %c1_i32 : i32
    %c1_i32_0 = arith.constant 1 : i32
    %1 = arith.subi %arg1, %c1_i32_0 : i32
    %2 = arith.select %0, %arg1, %1 : i32
    %c0_i32 = arith.constant 0 : i32
    %c0_i32_1 = arith.constant 0 : i32
    return %arg0, %c0_i32, %2 : i32, i32, i32
  }
  func.func @transform_2(%arg0: i32, %arg1: i32) -> (i32, i32, i32) {
    %c1_i32 = arith.constant 1 : i32
    %0 = arith.subi %arg1, %c1_i32 : i32
    %c0_i32 = arith.constant 0 : i32
    %1 = arith.maxsi %0, %c0_i32 : i32
    %c0_i32_0 = arith.constant 0 : i32
    %c0_i32_1 = arith.constant 0 : i32
    return %arg0, %c0_i32_0, %1 : i32, i32, i32
  }
}

</mosaic_0001>

<llo_original>
// kernel: tpu_custom_call.1
$region0: #{tpu_custom_call.1}
  #allocation0 [shape = 'u32[]', space=smem, size = 0x4, offset = 0x4, fixed_abs, tag = 'smem constant byte address 0x4 - core index']
  #allocation1 [shape = 'u32[144,128]{1,0:T(1,128)}', space=vmem, size = 0x12000, scoped, tag = 'internal scratch']
  #allocation2 [shape = 'f32[4,4]{1,0:T(4,128)}', space=vmem, size = 0x800, scoped, tag = 'scratch operand']
  #allocation3 [shape = 'f32[1]{0:T(128)S(6)}', space=smem, size = 0x200, scoped, tag = 'scoped memory for tpu_custom_call.1']
  %s0 = inlined_call_operand.<no memory space> [shape: f32[1], index: 0, kind: input, shape index: {}]
  %s1 = inlined_call_operand.hbm [shape: f32[2,4,256], index: 1, kind: input, shape index: {}]
  %s2 = inlined_call_operand.hbm [shape: f32[2,4,256], index: 2, kind: output, shape index: {}]
  %s3 = sld [smem:[#allocation0]]
  $region61: #{tpu_custom_call.1} parent=0
    _
  %s5 = ssub.s32 1, %s3
  %s6 = scalar_select 0, %s5, %s3
  %7 = sst [smem:[#allocation3]] %s0
  $region1: #{tpu_custom_call.1} parent=0
    #allocation4 [shape = 'u8[8192]{0}', space=vmem, size = 0x2000, scoped, tag = 'input window, operand 1']
    #allocation5 [shape = 's32[2]{0}', space=sflag, size = 0x8, scoped, tag = 'scoped memory for tpu_custom_call.1']
    #allocation6 [shape = 's32[2]{0}', space=sflag, size = 0x8, scoped, tag = 'scoped memory for tpu_custom_call.1']
    #allocation7 [shape = 'u8[8192]{0}', space=vmem, size = 0x2000, scoped, tag = 'output window, operand 0']
    %8 = vsyncpa [#allocation5], 0
    %s9 = scalar_lea.sflag [#allocation5], 1
    %10 = vsyncpa %s9, 0
    %11 = vsyncpa [#allocation6], 0
    %s12 = scalar_lea.sflag [#allocation6], 1
    %13 = vsyncpa %s12, 0
    loop: start=0, step=1, limit=6
    $region2: #{tpu_custom_call.1} parent=1 // loop_pre_header
      _
    $region3: #{tpu_custom_call.1} parent=1 // loop_header
      %s15 = sphi 0, %s19
      %p16 = scmp.ge.s32.totalorder %s15, 6
      %s22 = sphi 0, %s34
      %s23 = sphi 0, %s30
      %s24 = sphi 0, %s22
      %s25 = sphi 0, %s23
      %s26 = sphi 0, %s24
      %s27 = sphi 0, %s25
      %s35 = sphi 0, %s35
      %s37 = sphi 0, %s35
      %s38 = sphi 0, %s37
      %s52 = sphi 0, %s38
      %s66 = sphi 0, %s68
      %s69 = sphi 0, %s66
      %s70 = sphi 0, %s69
      %s86 = sphi 0, %s70
      %s100 = sphi 0, %s102
      %s103 = sphi 0, %s100
      %s104 = sphi 0, %s103
      %s120 = sphi 0, %s104
    $region4: #{tpu_custom_call.1} parent=1 // loop_header_branch
      %18 = sbr.rel (%p16) target = $region8
    $region5: #{tpu_custom_call.1} parent=1 // loop_body
      %s20 = ssub.s32 %s15, 1
      %s21 = ssub.s32 %s15, 2
      %s28 = sadd.s32 1, %s23
      %p29 = scmp.ge.s32.totalorder %s28, 2
      %s30 = scalar_select %p29, 0, %s28
      %s31 = sadd.s32 1, %s22
      %s32 = scalar_select %p29, %s31, %s22
      %p33 = scmp.ge.s32.totalorder %s32, 2
      %s34 = scalar_select %p33, 0, %s32
      %s36 = sadd.s32 %s35, 1
      %p39 = scmp.eq.s32.totalorder %s15, 3
      %p40 = scmp.ne.s32.totalorder %s35, %s37
      %p41 = scmp.eq.s32.totalorder %s15, 0
      %p42 = por %p40, %p41
      %p43 = scmp.ne.s32.totalorder %s35, %s37
      %p44 = scmp.eq.s32.totalorder %s20, 3
      %p45 = por %p43, %p44
      %p46 = scmp.ne.s32.totalorder %s37, %s38
      %p47 = scmp.eq.s32.totalorder %s20, 0
      %p48 = por %p46, %p47
      %p49 = scmp.ne.s32.totalorder %s37, %s38
      %p50 = scmp.eq.s32.totalorder %s21, 3
      %p51 = por %p49, %p50
      %p53 = scmp.ne.s32.totalorder %s38, %s52
      %p54 = scmp.eq.s32.totalorder %s21, 0
      %p55 = por %p53, %p54
      %p56 = scmp.lt.s32.totalorder %s23, 1
      %s57 = ssub.s32 %s23, 1
      %s58 = scalar_select %p56, %s23, %s57
      %p59 = scmp.lt.s32.totalorder %s30, 1
      %s60 = ssub.s32 %s30, 1
      %s61 = scalar_select %p59, %s30, %s60
      %s62 = ssub.s32 %s22, %s34
      %s63 = ssub.s32 %s58, %s61
      %s64 = sor.u32 %s62, %s63
      %p65 = scmp.eq.s32.totalorder %s64, 0
      %s67 = sadd.s32 %s66, 1
      %s68 = scalar_select %p65, %s66, %s67
      %p71 = pneg %p65
      %p72 = scmp.eq.s32.totalorder %s15, 3
      %p73 = por %p71, %p72
      %p74 = scmp.ne.s32.totalorder %s66, %s69
      %p75 = scmp.eq.s32.totalorder %s15, 0
      %p76 = por %p74, %p75
      %p77 = scmp.ne.s32.totalorder %s66, %s69
      %p78 = scmp.eq.s32.totalorder %s20, 3
      %p79 = por %p77, %p78
      %p80 = scmp.ne.s32.totalorder %s69, %s70
      %p81 = scmp.eq.s32.totalorder %s20, 0
      %p82 = por %p80, %p81
      %p83 = scmp.ne.s32.totalorder %s69, %s70
      %p84 = scmp.eq.s32.totalorder %s21, 3
      %p85 = por %p83, %p84
      %p87 = scmp.ne.s32.totalorder %s70, %s86
      %p88 = scmp.eq.s32.totalorder %s21, 0
      %p89 = por %p87, %p88
      %s90 = ssub.s32 %s23, 1
      %p91 = scmp.gt.s32.totalorder %s90, 0
      %s92 = scalar_select %p91, %s90, 0
      %s93 = ssub.s32 %s30, 1
      %p94 = scmp.gt.s32.totalorder %s93, 0
      %s95 = scalar_select %p94, %s93, 0
      %s96 = ssub.s32 %s22, %s34
      %s97 = ssub.s32 %s92, %s95
      %s98 = sor.u32 %s96, %s97
      %p99 = scmp.eq.s32.totalorder %s98, 0
      %s101 = sadd.s32 %s100, 1
      %s102 = scalar_select %p99, %s100, %s101
      %p105 = pneg %p99
      %p106 = scmp.eq.s32.totalorder %s15, 3
      %p107 = por %p105, %p106
      %p108 = scmp.ne.s32.totalorder %s100, %s103
      %p109 = scmp.eq.s32.totalorder %s15, 0
      %p110 = por %p108, %p109
      %p111 = scmp.ne.s32.totalorder %s100, %s103
      %p112 = scmp.eq.s32.totalorder %s20, 3
      %p113 = por %p111, %p112
      %p114 = scmp.ne.s32.totalorder %s103, %s104
      %p115 = scmp.eq.s32.totalorder %s20, 0
      %p116 = por %p114, %p115
      %p117 = scmp.ne.s32.totalorder %s103, %s104
      %p118 = scmp.eq.s32.totalorder %s21, 3
      %p119 = por %p117, %p118
      %p121 = scmp.ne.s32.totalorder %s104, %s120
      %p122 = scmp.eq.s32.totalorder %s21, 0
      %p123 = por %p121, %p122
      %p124 = scmp.le.s32.totalorder 1, %s15
      %p125 = scmp.lt.s32.totalorder %s15, 5
      %p126 = pnand %p124, %p125
      %p127 = pneg %p126
      // Predicated region
      $region9: #{tpu_custom_call.1} parent=5 // pred_check
        _
      $region10: #{tpu_custom_call.1} parent=5 // pred_check_branch
        %129 = sbr.rel (%p126) target = $region12
      $region11: #{tpu_custom_call.1} parent=5 // pred_region
        %s130 = ssub.s32 %s15, 1
        // Predicated region
        $region13: #{tpu_custom_call.1} parent=11 // pred_check
          %p131 = pneg %p48
        $region14: #{tpu_custom_call.1} parent=11 // pred_check_branch
          %133 = sbr.rel (%p131) target = $region16
        $region15: #{tpu_custom_call.1} parent=11 // pred_region
          _
        $region16: #{tpu_custom_call.1} parent=11 // pred_fallthru
          _
      $region12: #{tpu_custom_call.1} parent=5 // pred_fallthru
        _
      %p134 = scmp.lt.s32.totalorder %s15, 4
      // Predicated region
      $region17: #{tpu_custom_call.1} parent=5 // pred_check
        %p135 = pneg %p134
      $region18: #{tpu_custom_call.1} parent=5 // pred_check_branch
        %137 = sbr.rel (%p135) target = $region20
      $region19: #{tpu_custom_call.1} parent=5 // pred_region
        // Predicated region
        $region21: #{tpu_custom_call.1} parent=19 // pred_check
          %p138 = pneg %p76
        $region22: #{tpu_custom_call.1} parent=19 // pred_check_branch
          %140 = sbr.rel (%p138) target = $region24
        $region23: #{tpu_custom_call.1} parent=19 // pred_region
          %s141 = sand.u32 %s66, 1
          %s142 = scalar_lea.sflag [#allocation5], %s141
          %s143 = sand.u32 %s66, 1
          %s144 = smul.addr %s143, 8
          %s145 = scalar_lea.vmem [#allocation4], %s144
          %p146 = scmp.lt.s32.totalorder %s23, 1
          %s147 = ssub.s32 %s23, 1
          %s148 = scalar_select %p146, %s23, %s147
          %s149 = smul.u32 2, %s148
          %s151 = ssub.s32 128, 128
          %152 = vsyncadd %s142, %s151
          %s153 = smul.addr %s22, 2
          %s154 = sadd.s32 %s149, %s153
          %s155 = smul.addr %s154, 64
          %s156 = scalar_lea.hbm %s1, %s155
          %s158 = sshll.u32 %s145, 4
          %s159 = int_to_ptr.vmem [resolvable:$true] %s158
          %161 = dma.hbm_to_vmem [thread:$0]  %s156, 128, %s159, %s142
        $region24: #{tpu_custom_call.1} parent=19 // pred_fallthru
          _
      $region20: #{tpu_custom_call.1} parent=5 // pred_fallthru
        _
      %p162 = scmp.le.s32.totalorder 1, %s15
      %p163 = scmp.lt.s32.totalorder %s15, 5
      %p164 = pnand %p162, %p163
      %p165 = pneg %p164
      // Predicated region
      $region25: #{tpu_custom_call.1} parent=5 // pred_check
        _
      $region26: #{tpu_custom_call.1} parent=5 // pred_check_branch
        %167 = sbr.rel (%p164) target = $region28
      $region27: #{tpu_custom_call.1} parent=5 // pred_region
        %s168 = ssub.s32 %s15, 1
        %s169 = sand.u32 %s69, 1
        %s170 = scalar_lea.sflag [#allocation5], %s169
        %s171 = sand.u32 %s69, 1
        %s172 = smul.addr %s171, 8
        %s173 = scalar_lea.vmem [#allocation4], %s172
        // Predicated region
        $region29: #{tpu_custom_call.1} parent=27 // pred_check
          %p174 = pneg %p82
        $region30: #{tpu_custom_call.1} parent=27 // pred_check_branch
          %176 = sbr.rel (%p174) target = $region32
        $region31: #{tpu_custom_call.1} parent=27 // pred_region
          %177 = dma.done %s170, 128
        $region32: #{tpu_custom_call.1} parent=27 // pred_fallthru
          _
        %p178 = pneg %p48
        %p179 = pneg %p45
        %s180 = sand.u32 %s69, 1
        %s181 = scalar_lea.sflag [#allocation5], %s180
        %s182 = sand.u32 %s69, 1
        %s183 = smul.addr %s182, 8
        %s184 = scalar_lea.vmem [#allocation4], %s183
        %p185 = pneg %p82
        %p186 = pneg %p79
        %p187 = pneg %p116
        %p188 = pneg %p113
        %s189 = sand.u32 %s103, 1
        %s190 = scalar_lea.sflag [#allocation6], %s189
        %s191 = sand.u32 %s103, 1
        %s192 = smul.addr %s191, 8
        %s193 = scalar_lea.vmem [#allocation7], %s192
        %p194 = scmp.lt.s32.totalorder %s25, 1
        %s195 = ssub.s32 %s25, 1
        %s196 = scalar_select %p194, %s25, %s195
        %s197 = smul.u32 2, %s196
        %s198 = ssub.s32 %s25, 1
        %p199 = scmp.gt.s32.totalorder %s198, 0
        %s200 = scalar_select %p199, %s198, 0
        %s201 = smul.u32 2, %s200
        %v202 = vld [vmem:[%s173] sm:$0xff]
        %p203 = scmp.eq.s32.totalorder %s25, 0
        // Predicated region
        $region33: #{tpu_custom_call.1} parent=27 // pred_check
          %p204 = pneg %p203
        $region34: #{tpu_custom_call.1} parent=27 // pred_check_branch
          %206 = sbr.rel (%p204) target = $region36
        $region35: #{tpu_custom_call.1} parent=27 // pred_region
          %vm207 = vcmask 27648
          %208 = vst.msk [vmem:[#allocation2] sm:$0xf] %vm207, 0.0
        $region36: #{tpu_custom_call.1} parent=27 // pred_fallthru
          _
        %p209 = scmp.lt.s32.totalorder %s25, 1
        // Predicated region
        $region37: #{tpu_custom_call.1} parent=27 // pred_check
          %p210 = pneg %p209
        $region38: #{tpu_custom_call.1} parent=27 // pred_check_branch
          %212 = sbr.rel (%p210) target = $region40
        $region39: #{tpu_custom_call.1} parent=27 // pred_region
          %v213 = vld [vmem:[#allocation2] sm:$0xf]
          %v215 = vcombine.high %v202, %v202
          %217 = vmatprep.subr.mxu0 %v215
          %218 = vmatpush1.xpose.msra.mxu0 %v202
          %219 = vmatprep.subr.mxu0 0.0
          %220 = vmatpush1.xpose.msra.mxu0 0.0
          %221 = vmatprep.subr.mxu0 0.0
          %222 = vmatpush1.xpose.msra.mxu0 0.0
          %223 = vmatprep.subr.mxu0 0.0
          %224 = vmatpush1.xpose.msra.mxu0 0.0
          %225 = vmatprep.subr.mxu0 0.0
          %226 = vmatpush1.xpose.msra.mxu0 0.0
          %227 = vmatprep.subr.mxu0 0.0
          %228 = vmatpush1.xpose.msra.mxu0 0.0
          %229 = vmatprep.subr.mxu0 0.0
          %230 = vmatpush1.xpose.msra.mxu0 0.0
          %231 = vmatprep.subr.mxu0 0.0
          %232 = vmatpush1.xpose.msra.mxu0 0.0
          %233 = vmatprep.subr.mxu0 0.0
          %234 = vmatpush1.xpose.msra.mxu0 0.0
          %235 = vmatprep.subr.mxu0 0.0
          %236 = vmatpush1.xpose.msra.mxu0 0.0
          %237 = vmatprep.subr.mxu0 0.0
          %238 = vmatpush1.xpose.msra.mxu0 0.0
          %239 = vmatprep.subr.mxu0 0.0
          %240 = vmatpush1.xpose.msra.mxu0 0.0
          %241 = vmatprep.subr.mxu0 0.0
          %242 = vmatpush1.xpose.msra.mxu0 0.0
          %243 = vmatprep.subr.mxu0 0.0
          %244 = vmatpush1.xpose.msra.mxu0 0.0
          %245 = vmatprep.subr.mxu0 0.0
          %246 = vmatpush1.xpose.msra.mxu0 0.0
          %247 = vmatprep.subr.mxu0 0.0
          %248 = vmatpush1.xpose.msra.mxu0 0.0
          %249 = vmatprep.subr.mxu0 0.0
          %250 = vmatpush1.xpose.msra.mxu0 0.0
          %251 = vmatprep.subr.mxu0 0.0
          %252 = vmatpush1.xpose.msra.mxu0 0.0
          %253 = vmatprep.subr.mxu0 0.0
          %254 = vmatpush1.xpose.msra.mxu0 0.0
          %255 = vmatprep.subr.mxu0 0.0
          %256 = vmatpush1.xpose.msra.mxu0 0.0
          %257 = vmatprep.subr.mxu0 0.0
          %258 = vmatpush1.xpose.msra.mxu0 0.0
          %259 = vmatprep.subr.mxu0 0.0
          %260 = vmatpush1.xpose.msra.mxu0 0.0
          %261 = vmatprep.subr.mxu0 0.0
          %262 = vmatpush1.xpose.msra.mxu0 0.0
          %263 = vmatprep.subr.mxu0 0.0
          %264 = vmatpush1.xpose.msra.mxu0 0.0
          %265 = vmatprep.subr.mxu0 0.0
          %266 = vmatpush1.xpose.msra.mxu0 0.0
          %267 = vmatprep.subr.mxu0 0.0
          %268 = vmatpush1.xpose.msra.mxu0 0.0
          %269 = vmatprep.subr.mxu0 0.0
          %270 = vmatpush1.xpose.msra.mxu0 0.0
          %271 = vmatprep.subr.mxu0 0.0
          %272 = vmatpush1.xpose.msra.mxu0 0.0
          %273 = vmatprep.subr.mxu0 0.0
          %274 = vmatpush1.xpose.msra.mxu0 0.0
          %275 = vmatprep.subr.mxu0 0.0
          %276 = vmatpush1.xpose.msra.mxu0 0.0
          %277 = vmatprep.subr.mxu0 0.0
          %278 = vmatpush1.xpose.msra.mxu0 0.0
          %279 = vmatprep.subr.mxu0 0.0
          %280 = vmatpush1.xpose.msra.mxu0 0.0
          %281 = vmatprep.mubr.f32.mxu0 %v215
          %282 = vmatmul.mubr.f32.gmra.mrb[0].mxu0 %v202
          %v283 = vpop.f32.mrb[0].mxu0
          %v284 = vadd.f32 0.0, %v283
          %v285 = vpop.f32.mrb[0].mxu0
          %286 = vdwg.mxu0
          %v287 = vadd.f32 %v213, %v284
          %vm288 = vcmask 27648
          %289 = vst.msk [vmem:[#allocation2] sm:$0xf] %vm288, %v287
        $region40: #{tpu_custom_call.1} parent=27 // pred_fallthru
          _
        // Predicated region
        $region41: #{tpu_custom_call.1} parent=27 // pred_check
          %p290 = pneg %p203
        $region42: #{tpu_custom_call.1} parent=27 // pred_check_branch
          %292 = sbr.rel (%p290) target = $region44
        $region43: #{tpu_custom_call.1} parent=27 // pred_region
          %v293 = vld [vmem:[#allocation2] sm:$0xf]
          %vm294 = vcmask 27648
          %v295 = vsel %vm294, %v293, inf
          %296 = vmin.xlane.f32.xlu0 %v295
          %v297 = vpop.xlane.xlu0 %296
          %v298 = vsub.f32 %v297, %v293
          %v299 = vmul.f32 %v298, 1.442695
          %v300 = vpow.pop %v299
          %v301 = vsel %vm294, %v300, 0.0
          %302 = vadd.xlane.f32.xlu0 %v301
          %v303 = vpop.xlane.xlu0 %302
          %v304 = vrcp.pop %v303
          %v305 = vmul.f32 %v303, %v304
          %v306 = vsub.f32 2.0, %v305
          %v307 = vmul.f32 %v304, %v306
          %v308 = vmul.f32 %v300, %v307
          %309 = vst.msk [vmem:[#allocation2] sm:$0xf] %vm294, %v308
        $region44: #{tpu_custom_call.1} parent=27 // pred_fallthru
          _
        %p310 = scmp.ge.s32.totalorder %s25, 1
        // Predicated region
        $region45: #{tpu_custom_call.1} parent=27 // pred_check
          %p311 = pneg %p310
        $region46: #{tpu_custom_call.1} parent=27 // pred_check_branch
          %313 = sbr.rel (%p311) target = $region48
        $region47: #{tpu_custom_call.1} parent=27 // pred_region
          %v314 = vld [vmem:[#allocation2] sm:$0xf]
          %v316 = vcombine.high %v202, %v202
          %vm317 = vcmask 31744
          %v319 = vsel %vm317, %v314, 0
          %vm321 = vcmask 1043456
          %v322 = vsel %vm321, %v202, 0
          %v324 = vsel %vm321, %v316, 0
          %326 = vmatprep.subr.mxu0 %v324
          %327 = vmatpush1.msra.mxu0 %v322
          %328 = vmatprep.subr.mxu0 0.0
          %329 = vmatpush1.msra.mxu0 0.0
          %330 = vmatprep.subr.mxu0 0.0
          %331 = vmatpush1.msra.mxu0 0.0
          %332 = vmatprep.subr.mxu0 0.0
          %333 = vmatpush1.msra.mxu0 0.0
          %334 = vmatprep.subr.mxu0 0.0
          %335 = vmatpush1.msra.mxu0 0.0
          %336 = vmatprep.subr.mxu0 0.0
          %337 = vmatpush1.msra.mxu0 0.0
          %338 = vmatprep.subr.mxu0 0.0
          %339 = vmatpush1.msra.mxu0 0.0
          %340 = vmatprep.subr.mxu0 0.0
          %341 = vmatpush1.msra.mxu0 0.0
          %342 = vmatprep.subr.mxu0 0.0
          %343 = vmatpush1.msra.mxu0 0.0
          %344 = vmatprep.subr.mxu0 0.0
          %345 = vmatpush1.msra.mxu0 0.0
          %346 = vmatprep.subr.mxu0 0.0
          %347 = vmatpush1.msra.mxu0 0.0
          %348 = vmatprep.subr.mxu0 0.0
          %349 = vmatpush1.msra.mxu0 0.0
          %350 = vmatprep.subr.mxu0 0.0
          %351 = vmatpush1.msra.mxu0 0.0
          %352 = vmatprep.subr.mxu0 0.0
          %353 = vmatpush1.msra.mxu0 0.0
          %354 = vmatprep.subr.mxu0 0.0
          %355 = vmatpush1.msra.mxu0 0.0
          %356 = vmatprep.subr.mxu0 0.0
          %357 = vmatpush1.msra.mxu0 0.0
          %358 = vmatprep.subr.mxu0 0.0
          %359 = vmatpush1.msra.mxu0 0.0
          %360 = vmatprep.subr.mxu0 0.0
          %361 = vmatpush1.msra.mxu0 0.0
          %362 = vmatprep.subr.mxu0 0.0
          %363 = vmatpush1.msra.mxu0 0.0
          %364 = vmatprep.subr.mxu0 0.0
          %365 = vmatpush1.msra.mxu0 0.0
          %366 = vmatprep.subr.mxu0 0.0
          %367 = vmatpush1.msra.mxu0 0.0
          %368 = vmatprep.subr.mxu0 0.0
          %369 = vmatpush1.msra.mxu0 0.0
          %370 = vmatprep.subr.mxu0 0.0
          %371 = vmatpush1.msra.mxu0 0.0
          %372 = vmatprep.subr.mxu0 0.0
          %373 = vmatpush1.msra.mxu0 0.0
          %374 = vmatprep.subr.mxu0 0.0
          %375 = vmatpush1.msra.mxu0 0.0
          %376 = vmatprep.subr.mxu0 0.0
          %377 = vmatpush1.msra.mxu0 0.0
          %378 = vmatprep.subr.mxu0 0.0
          %379 = vmatpush1.msra.mxu0 0.0
          %380 = vmatprep.subr.mxu0 0.0
          %381 = vmatpush1.msra.mxu0 0.0
          %382 = vmatprep.subr.mxu0 0.0
          %383 = vmatpush1.msra.mxu0 0.0
          %384 = vmatprep.subr.mxu0 0.0
          %385 = vmatpush1.msra.mxu0 0.0
          %386 = vmatprep.subr.mxu0 0.0
          %387 = vmatpush1.msra.mxu0 0.0
          %388 = vmatprep.subr.mxu0 0.0
          %389 = vmatpush1.msra.mxu0 0.0
          %390 = vmatprep.mubr.f32.mxu0 0.0
          %391 = vmatmul.mubr.f32.gmra.mrb[0].mxu0 %v319
          %v392 = vpop.f32.mrb[0].mxu0
          %v393 = vadd.f32 0.0, %v392
          %v394 = vpop.f32.mrb[0].mxu0
          %v395 = vadd.f32 0.0, %v394
          %396 = vdwg.mxu0
          %s397 = sld [smem:[#allocation3]]
          %v398 = vstv %s397
          %v399 = vmul.f32 %v398, %v393
          %v400 = vmul.f32 %v398, %v395
          %v402 = vadd.f32 %v399, %v202
          %v403 = vadd.f32 %v400, %v316
          %v406 = vcombine.low %v402, %v403
          %408 = vst [vmem:[%s193] sm:$0xff] %v406
        $region48: #{tpu_custom_call.1} parent=27 // pred_fallthru
          _
        %s409 = sand.u32 %s103, 1
        %s410 = scalar_lea.sflag [#allocation6], %s409
        %s411 = sand.u32 %s103, 1
        %s412 = smul.addr %s411, 8
        %s413 = scalar_lea.vmem [#allocation7], %s412
        // Predicated region
        $region49: #{tpu_custom_call.1} parent=27 // pred_check
          %p414 = pneg %p113
        $region50: #{tpu_custom_call.1} parent=27 // pred_check_branch
          %416 = sbr.rel (%p414) target = $region52
        $region51: #{tpu_custom_call.1} parent=27 // pred_region
          %s417 = ssub.s32 %s25, 1
          %p418 = scmp.gt.s32.totalorder %s417, 0
          %s419 = scalar_select %p418, %s417, 0
          %s420 = smul.u32 2, %s419
          %s422 = ssub.s32 128, 128
          %423 = vsyncadd %s410, %s422
          %s424 = smul.addr %s24, 2
          %s425 = sadd.s32 %s420, %s424
          %s426 = smul.addr %s425, 64
          %s427 = scalar_lea.hbm %s2, %s426
          %s429 = sshll.u32 %s413, 4
          %s430 = int_to_ptr.vmem [resolvable:$true] %s429
          %432 = dma.vmem_to_hbm [thread:$0]  %s430, 128, %s427, %s410
        $region52: #{tpu_custom_call.1} parent=27 // pred_fallthru
          _
      $region28: #{tpu_custom_call.1} parent=5 // pred_fallthru
        _
      %p433 = scmp.le.s32.totalorder 2, %s15
      // Predicated region
      $region53: #{tpu_custom_call.1} parent=5 // pred_check
        %p434 = pneg %p433
      $region54: #{tpu_custom_call.1} parent=5 // pred_check_branch
        %436 = sbr.rel (%p434) target = $region56
      $region55: #{tpu_custom_call.1} parent=5 // pred_region
        %s437 = ssub.s32 %s15, 2
        // Predicated region
        $region57: #{tpu_custom_call.1} parent=55 // pred_check
          %p438 = pneg %p119
        $region58: #{tpu_custom_call.1} parent=55 // pred_check_branch
          %440 = sbr.rel (%p438) target = $region60
        $region59: #{tpu_custom_call.1} parent=55 // pred_region
          %s441 = sand.u32 %s104, 1
          %s442 = scalar_lea.sflag [#allocation6], %s441
          %s443 = sand.u32 %s104, 1
          %s444 = smul.addr %s443, 8
          %s445 = scalar_lea.vmem [#allocation7], %s444
          %446 = dma.done %s442, 128
        $region60: #{tpu_custom_call.1} parent=55 // pred_fallthru
          _
      $region56: #{tpu_custom_call.1} parent=5 // pred_fallthru
        _
    $region6: #{tpu_custom_call.1} parent=1 // loop_footer
      %s19 = sadd.s32 1, %s15
    $region7: #{tpu_custom_call.1} parent=1 // loop_footer_branch
      %14 = sbr.rel target = $region3
    $region8: #{tpu_custom_call.1} parent=1 // loop_exit
      _
    %447 = vsyncpa [#allocation5], 1
    %s448 = scalar_lea.sflag [#allocation5], 1
    %449 = vsyncpa %s448, 1
    %450 = vsyncpa [#allocation6], 1
    %s451 = scalar_lea.sflag [#allocation6], 1
    %452 = vsyncpa %s451, 1

</llo_original>
